<compile_context>
chip_gen: v5e
topology: v5e:2x2
jax: 0.10.0
libtpu: 0.0.40
codegen_flags: <defaults>
</compile_context>

<pallas_src>
import functools
import math

import jax
import jax.numpy as jnp
from jax.experimental import pallas as pl
from jax.experimental.pallas import tpu as pltpu

EPS = 1e-8          # matches module-level EPS
LN_EPS = 1e-5       # torch.nn.LayerNorm default eps


def _selector_kernel(x_ref, proto_ref, psum_ref, experts_ref, weights_ref, *, k, inv_d):
    """One token tile.

    x_ref:       (Tt, D)   tokens on sublanes, hidden on lanes (native dtype).
    proto_ref:   (E+1, D)  rows 0..E-1: unit-normalized prototypes pre-scaled by 1/temp
                           (op dtype); row E: ones -> per-token sums fall out of the MXU.
    psum_ref:    (E, 1)    f32 row-sums of the (quantized) prototype rows.
    experts_ref: (K, Tt)   int32   -- tokens on the LANE axis (unmasked lane-dense stores)
    weights_ref: (K, Tt)   float32
    """
    tt = x_ref.shape[0]
    num_e = proto_ref.shape[0] - 1

    xm = x_ref[...]
    if xm.dtype != proto_ref.dtype:
        xm = xm.astype(proto_ref.dtype)

    # [P/temp ; 1] @ x^T -> (E+1, Tt), f32 accumulation, tokens on lanes.
    # Rows 0..E-1: raw prototype similarities (pre-LayerNorm); row E: sum_d x.
    raw_aug = jax.lax.dot_general(
        proto_ref[...], xm,
        dimension_numbers=(((1,), (1,)), ((), ())),
        preferred_element_type=jnp.float32)
    raw = raw_aug[:num_e, :]                                  # (E, Tt)
    mean = raw_aug[num_e:, :] * inv_d                         # (1, Tt)

    # Second matmul against x*x yields sum_d x^2 in the SAME lane-major orientation
    # (row E), so no (Tt,1)->(1,Tt) relayout is needed anywhere.  The extra E rows are
    # wasted MACs, but the kernel is HBM-bound (~2(E+1) MAC/byte), so this is free;
    # for very large E one would slice proto_ref.at[num_e:] as the LHS instead.
    sq_aug = jax.lax.dot_general(
        proto_ref[...], xm * xm,
        dimension_numbers=(((1,), (1,)), ((), ())),
        preferred_element_type=jnp.float32)
    ex2 = sq_aug[num_e:, :] * inv_d                           # (1, Tt)

    var = jnp.maximum(ex2 - mean * mean, 0.0)
    inv_std = jax.lax.rsqrt(var + LN_EPS)                     # (1, Tt)

    # Folded LayerNorm (input_norm_fn='norm_d'); inv_std > 0 and 1/temp > 0, so
    #   |((x-mean)*inv_std) @ (P/temp)^T| = |P/temp @ x^T - rowsum(P/temp)*mean| * inv_std
    logits = jnp.abs(raw - psum_ref[...] * mean) * inv_std    # (E, Tt)

    ids = jax.lax.broadcasted_iota(jnp.int32, (num_e, tt), 0)

    # Iterative top-k over the expert (sublane) axis; lowest index wins exact ties
    # (matches jax.lax.top_k).  NaN logits would select index num_e (out of range);
    # harmless for finite inputs.
    vals, idxs = [], []
    cur = logits
    for _ in range(k):
        m = jnp.max(cur, axis=0, keepdims=True)                                 # (1, Tt)
        idx = jnp.min(jnp.where(cur == m, ids, num_e), axis=0, keepdims=True)   # (1, Tt)
        vals.append(m)
        idxs.append(idx)
        cur = jnp.where(ids == idx, -jnp.inf, cur)

    # Stack the k (1, Tt) rows into (K, Tt) outputs (sublane broadcast + select).
    row = jax.lax.broadcasted_iota(jnp.int32, (k, tt), 0)
    exp_out = jnp.zeros((k, tt), jnp.int32)
    val_out = jnp.zeros((k, tt), jnp.float32)
    for j in range(k):
        exp_out = jnp.where(row == j, idxs[j], exp_out)
        val_out = jnp.where(row == j, vals[j], val_out)

    # router_probs = softmax(top-k logits); exact normalization (denominator is a
    # tiny (1, Tt) array, approx reciprocal buys nothing and breaks sum-to-1).
    exps = jnp.exp(val_out - vals[0])
    denom = jnp.sum(exps, axis=0, keepdims=True)
    experts_ref[...] = exp_out
    weights_ref[...] = exps / denom


def _choose_tile(T, token_tile):
    """Largest tile that divides T, is <= token_tile and is a multiple of 128 (so the
    (K, tile) output stores stay unmasked / lane-dense).  Keeps >= 2 grid steps when T
    is large enough so the single 'parallel' axis can feed both v7x TensorCores.
    Falls back to one full block for small/awkward T."""
    limit = max(1, min(token_tile, T))
    if T >= 512 and limit * 2 > T:
        limit = T // 2
    t = (limit // 128) * 128
    while t >= 128:
        if T % t == 0:
            return t
        t -= 128
    return T


def per_token_selector(x, prototypes, *, router_temp=-1.0, moe_top_k=2,
                       token_tile=1024, mxu_dtype=None, input_buffers=2):
    """Returns (experts [B,S,K] int32, weights [B,S,K] float32).

    token_tile:    primary tuning knob (multiple of 128; 1024-2048 on v5e/v6e, the
                   VMEM budget auto-shrinks it on v7x when D is large).
    mxu_dtype:     MXU operand dtype.  Defaults to bfloat16 for f32 inputs (pass
                   jnp.float32 for a bit-faithful f32 path); bf16/f16 inputs keep
                   their native dtype so the dominant HBM read stays narrow.
    input_buffers: pipeline depth for the streamed token tile (2 = default double
                   buffering; 3 can hide DMA jitter if the input DMA is exposed).
    """
    B, S, D = x.shape
    E, D2 = prototypes.shape
    assert D == D2, "hidden dims must match"
    assert moe_top_k <= E, "moe_top_k must be <= number of experts"
    T = B * S
    temp = float(router_temp) if router_temp > 0 else math.sqrt(D)

    # MXU operand dtype (feedback: default to bf16; f32 only when explicitly asked).
    if mxu_dtype is not None:
        op_dtype = jnp.dtype(mxu_dtype)
    elif jnp.dtype(x.dtype) == jnp.dtype(jnp.float32):
        op_dtype = jnp.dtype(jnp.bfloat16)
    else:
        op_dtype = jnp.dtype(x.dtype)

    # Keep x in its native dtype (no wrapper upcast -> no extra HBM traffic).
    x_flat = x.reshape(T, D)

    # proto_norm_fn == 'unit' (row-wise L2, clamped at EPS) with 1/temp folded in;
    # hoisted out of the grid loop.  A ones row is appended so the kernel's matmul
    # also produces per-token sums (folded LayerNorm), and the f32 row-sums feed the
    # mean-correction term.
    p32 = prototypes.astype(jnp.float32)
    p_unit = p32 / jnp.maximum(
        jnp.sqrt(jnp.sum(p32 * p32, axis=-1, keepdims=True)), EPS)
    p_scaled = (p_unit * (1.0 / temp)).astype(op_dtype)               # (E, D)
    p_aug = jnp.concatenate([p_scaled, jnp.ones((1, D), op_dtype)], axis=0)  # (E+1, D)
    p_rowsum = jnp.sum(p_scaled.astype(jnp.float32), axis=-1, keepdims=True)  # (E, 1)

    # --- tiling + VMEM budgeting -------------------------------------------------
    x_item = jnp.dtype(x.dtype).itemsize
    op_item = op_dtype.itemsize
    k = moe_top_k

    def footprint(t):
        cast_extra = 0 if jnp.dtype(x.dtype) == op_dtype else t * D * op_item
        return (input_buffers * t * D * x_item            # streamed token tile
                + 2 * (E + 1) * D * op_item               # resident (double-buffered) protos
                + 2 * max(E, 8) * 128 * 4                 # prototype row-sums (padded)
                + 4 * k * max(t, 128) * 4                 # double-buffered outputs
                + cast_extra + t * D * op_item            # in-kernel cast / x*x temporaries
                + 8 * max(E + 1, 8) * max(t, 128) * 4     # (E, tile) f32 working arrays
                + (2 << 20))                              # slack

    try:
        vmem_cap = int(pltpu.get_tpu_info().vmem_capacity_bytes)
    except Exception:
        vmem_cap = 64 * 1024 * 1024                       # conservative (v7x) fallback
    budget = int(0.75 * vmem_cap)                         # never request the whole VMEM

    tile = _choose_tile(T, token_tile)
    while tile > 128 and footprint(tile) > budget:
        smaller = _choose_tile(T, tile // 2)
        if smaller >= tile:
            break
        tile = smaller
    assert T % tile == 0
    vmem_limit = int(min(budget, max(32 * 1024 * 1024, int(1.25 * footprint(tile)))))

    # --- pallas call ---------------------------------------------------------------
    kernel = functools.partial(_selector_kernel, k=k, inv_d=1.0 / D)

    if input_buffers != 2:
        x_spec = pl.BlockSpec((tile, D), lambda i: (i, 0),
                              pipeline_mode=pl.Buffered(input_buffers))
    else:
        x_spec = pl.BlockSpec((tile, D), lambda i: (i, 0))

    cost = pl.CostEstimate(
        flops=4 * T * D * (E + 1),                        # two MXU passes over the tile
        transcendentals=T * (k + 1),                      # exp per selected logit + rsqrt
        bytes_accessed=(T * D * x_item + (E + 1) * D * op_item
                        + E * 4 + 2 * T * k * 4))

    experts_t, weights_t = pl.pallas_call(
        kernel,
        out_shape=(
            jax.ShapeDtypeStruct((k, T), jnp.int32),
            jax.ShapeDtypeStruct((k, T), jnp.float32),
        ),
        grid=(T // tile,),
        in_specs=[
            x_spec,                                        # streamed token tile (native dtype)
            pl.BlockSpec((E + 1, D), lambda i: (0, 0)),    # resident prototypes (+ ones row)
            pl.BlockSpec((E, 1), lambda i: (0, 0)),        # resident prototype row-sums
        ],
        out_specs=(
            pl.BlockSpec((k, tile), lambda i: (0, i)),     # lane-dense stores (tokens on lanes)
            pl.BlockSpec((k, tile), lambda i: (0, i)),
        ),
        compiler_params=pltpu.CompilerParams(
            dimension_semantics=("parallel",),
            vmem_limit_bytes=vmem_limit),
        cost_estimate=cost,
    )(x_flat, p_aug, p_rowsum)

    experts = experts_t.T.reshape(B, S, k)
    weights = weights_t.T.reshape(B, S, k)
    return experts, weights


def _reference(x, prototypes, *, router_temp=-1.0, moe_top_k=2):
    """Pure-JAX reference of the prototype-router forward (same config)."""
    D = x.shape[-1]
    temp = float(router_temp) if router_temp > 0 else math.sqrt(D)
    x = x.astype(jnp.float32)
    mean = x.mean(-1, keepdims=True)
    var = ((x - mean) ** 2).mean(-1, keepdims=True)
    xn = (x - mean) / jnp.sqrt(var + LN_EPS)
    p32 = prototypes.astype(jnp.float32)
    pn = p32 / jnp.maximum(jnp.linalg.norm(p32, axis=-1, keepdims=True), EPS)
    logits = jnp.abs(jnp.einsum("bsd,ed->bse", xn, pn,
                                precision=jax.lax.Precision.HIGHEST)) / temp
    top_v, top_i = jax.lax.top_k(logits, moe_top_k)
    probs = jax.nn.softmax(top_v, axis=-1)
    return top_i.astype(jnp.int32), probs


if __name__ == "__main__":
    B, S, D, E, K = 2, 8, 32, 8, 2

    key = jax.random.PRNGKey(0)
    kx, kp = jax.random.split(key)
    x = jax.random.normal(kx, (B, S, D), dtype=jnp.float32)
    prototypes = jax.random.normal(kp, (E, D), dtype=jnp.float32)

    # 1) strict f32 check against the pure-JAX reference (force f32 MXU operands).
    experts, weights = per_token_selector(
        x, prototypes, router_temp=-1.0, moe_top_k=K, mxu_dtype=jnp.float32)
    jax.block_until_ready((experts, weights))

    ref_experts, ref_weights = _reference(x, prototypes, router_temp=-1.0, moe_top_k=K)
    assert experts.shape == (B, S, K) and weights.shape == (B, S, K)
    assert jnp.all(experts == ref_experts), "expert indices mismatch (f32 path)"
    assert jnp.allclose(weights, ref_weights, atol=2e-3), "weights mismatch (f32 path)"

    # 2) default path: bf16 MXU operands (intended fast path on v5e/v6e/v7x).
    e2, w2 = per_token_selector(x, prototypes, router_temp=-1.0, moe_top_k=K)
    jax.block_until_ready((e2, w2))
    assert e2.shape == (B, S, K) and w2.shape == (B, S, K)
    assert bool(jnp.all((e2 >= 0) & (e2 < E)))
    assert bool(jnp.all(jnp.isfinite(w2)))
    assert jnp.allclose(jnp.sum(w2, axis=-1), 1.0, atol=1e-3)

    # 3) bf16 activations: native-dtype input DMA (halves the dominant HBM read).
    x_bf16 = x.astype(jnp.bfloat16)
    e3, w3 = per_token_selector(x_bf16, prototypes, router_temp=-1.0, moe_top_k=K)
    jax.block_until_ready((e3, w3))
    assert e3.shape == (B, S, K) and w3.shape == (B, S, K)
    assert bool(jnp.all((e3 >= 0) & (e3 < E)))
    assert bool(jnp.all(jnp.isfinite(w3)))
    assert jnp.allclose(jnp.sum(w3, axis=-1), 1.0, atol=1e-3)

    # TODO(synk): the text-ranker routing (expert_ranker.predict_task over
    # routing_infos.sources_texts), forward cache / call counting and logging hooks are
    # host-side side effects with no Pallas equivalent; only the tensor routing math is
    # ported here.
    print("KERNEL_OK")
</pallas_src>

<mosaic_0001>
module attributes {stable_mosaic.version = 11 : i64} {
  func.func @_selector_kernel(%arg0: i32, %arg1: memref<16x32xf32, #tpu.memory_space<vmem>>, %arg2: memref<9x32xf32, #tpu.memory_space<vmem>>, %arg3: memref<8x1xf32, #tpu.memory_space<vmem>>, %arg4: memref<2x16xi32, #tpu.memory_space<vmem>>, %arg5: memref<2x16xf32, #tpu.memory_space<vmem>>) attributes {dimension_semantics = [#tpu.dimension_semantics<parallel>], iteration_bounds = array<i64: 1>, scalar_prefetch = 0 : i64, scratch_operands = 0 : i64, tpu.core_type = #tpu.core_type<tc>, window_params = [{transform_indices = @transform_0, window_bounds = array<i64: 16, 32>}, {pipeline_mode = #tpu.pipeline_mode<synchronous>, transform_indices = @transform_1, window_bounds = array<i64: 9, 32>}, {pipeline_mode = #tpu.pipeline_mode<synchronous>, transform_indices = @transform_2, window_bounds = array<i64: 8, 1>}, {transform_indices = @transform_3, window_bounds = array<i64: 2, 16>}, {transform_indices = @transform_4, window_bounds = array<i64: 2, 16>}]} {
    %c0 = arith.constant 0 : index
    %c0_0 = arith.constant 0 : index
    %0 = vector.load %arg1[%c0, %c0_0] : memref<16x32xf32, #tpu.memory_space<vmem>>, vector<16x32xf32>
    %c0_1 = arith.constant 0 : index
    %c0_2 = arith.constant 0 : index
    %1 = vector.load %arg2[%c0_1, %c0_2] : memref<9x32xf32, #tpu.memory_space<vmem>>, vector<9x32xf32>
    %cst = arith.constant dense<0.000000e+00> : vector<9x16xf32>
    %2 = tpu.matmul %1, %0, %cst {dimension_numbers = #tpu.dot_dimension_numbers<[1], [1], [0], [0], [0, 0, 1, 0], [], []>} : vector<9x32xf32>, vector<16x32xf32>, vector<9x16xf32> -> vector<9x16xf32>
    %3 = vector.extract_strided_slice %2 {offsets = [0, 0], sizes = [8, 16], strides = [1, 1]} : vector<9x16xf32> to vector<8x16xf32>
    %4 = vector.extract_strided_slice %2 {offsets = [8, 0], sizes = [1, 16], strides = [1, 1]} : vector<9x16xf32> to vector<1x16xf32>
    %cst_3 = arith.constant 3.125000e-02 : f32
    %5 = vector.broadcast %cst_3 : f32 to vector<1x16xf32>
    %6 = arith.mulf %4, %5 : vector<1x16xf32>
    %c0_4 = arith.constant 0 : index
    %c0_5 = arith.constant 0 : index
    %7 = vector.load %arg2[%c0_4, %c0_5] : memref<9x32xf32, #tpu.memory_space<vmem>>, vector<9x32xf32>
    %8 = arith.mulf %0, %0 : vector<16x32xf32>
    %cst_6 = arith.constant dense<0.000000e+00> : vector<9x16xf32>
    %9 = tpu.matmul %7, %8, %cst_6 {dimension_numbers = #tpu.dot_dimension_numbers<[1], [1], [0], [0], [0, 0, 1, 0], [], []>} : vector<9x32xf32>, vector<16x32xf32>, vector<9x16xf32> -> vector<9x16xf32>
    %10 = vector.extract_strided_slice %9 {offsets = [8, 0], sizes = [1, 16], strides = [1, 1]} : vector<9x16xf32> to vector<1x16xf32>
    %cst_7 = arith.constant 3.125000e-02 : f32
    %11 = vector.broadcast %cst_7 : f32 to vector<1x16xf32>
    %12 = arith.mulf %10, %11 : vector<1x16xf32>
    %13 = arith.mulf %6, %6 : vector<1x16xf32>
    %14 = arith.subf %12, %13 : vector<1x16xf32>
    %cst_8 = arith.constant 0.000000e+00 : f32
    %15 = vector.broadcast %cst_8 : f32 to vector<1x16xf32>
    %16 = arith.maximumf %14, %15 : vector<1x16xf32>
    %cst_9 = arith.constant 9.99999974E-6 : f32
    %17 = vector.broadcast %cst_9 : f32 to vector<1x16xf32>
    %18 = arith.addf %16, %17 : vector<1x16xf32>
    %19 = math.rsqrt %18 : vector<1x16xf32>
    %c0_10 = arith.constant 0 : index
    %c0_11 = arith.constant 0 : index
    %20 = vector.load %arg3[%c0_10, %c0_11] : memref<8x1xf32, #tpu.memory_space<vmem>>, vector<8x1xf32>
    %21 = vector.broadcast %20 : vector<8x1xf32> to vector<8x16xf32>
    %22 = vector.broadcast %6 : vector<1x16xf32> to vector<8x16xf32>
    %23 = arith.mulf %21, %22 : vector<8x16xf32>
    %24 = arith.subf %3, %23 : vector<8x16xf32>
    %25 = math.absf %24 : vector<8x16xf32>
    %26 = vector.broadcast %19 : vector<1x16xf32> to vector<8x16xf32>
    %27 = arith.mulf %25, %26 : vector<8x16xf32>
    %28 = tpu.iota {dimensions = array<i32: 0>} : vector<8x16xi32>
    %cst_12 = arith.constant dense<0xFF800000> : vector<16xf32>
    %29 = vector.multi_reduction <maximumf>, %27, %cst_12 [0] : vector<8x16xf32> to vector<16xf32>
    %30 = vector.shape_cast %29 : vector<16xf32> to vector<1x16xf32>
    %31 = vector.broadcast %30 : vector<1x16xf32> to vector<8x16xf32>
    %32 = arith.cmpf oeq, %27, %31 : vector<8x16xf32>
    %c8_i32 = arith.constant 8 : i32
    %33 = vector.broadcast %c8_i32 : i32 to vector<8x16xi32>
    %34 = arith.select %32, %28, %33 : vector<8x16xi1>, vector<8x16xi32>
    %cst_13 = arith.constant dense<2147483647> : vector<16xi32>
    %35 = vector.multi_reduction <minsi>, %34, %cst_13 [0] : vector<8x16xi32> to vector<16xi32>
    %36 = vector.shape_cast %35 : vector<16xi32> to vector<1x16xi32>
    %37 = vector.broadcast %36 : vector<1x16xi32> to vector<8x16xi32>
    %38 = arith.cmpi eq, %28, %37 : vector<8x16xi32>
    %cst_14 = arith.constant 0xFF800000 : f32
    %39 = vector.broadcast %cst_14 : f32 to vector<8x16xf32>
    %40 = arith.select %38, %39, %27 : vector<8x16xi1>, vector<8x16xf32>
    %cst_15 = arith.constant dense<0xFF800000> : vector<16xf32>
    %41 = vector.multi_reduction <maximumf>, %40, %cst_15 [0] : vector<8x16xf32> to vector<16xf32>
    %42 = vector.shape_cast %41 : vector<16xf32> to vector<1x16xf32>
    %43 = vector.broadcast %42 : vector<1x16xf32> to vector<8x16xf32>
    %44 = arith.cmpf oeq, %40, %43 : vector<8x16xf32>
    %c8_i32_16 = arith.constant 8 : i32
    %45 = vector.broadcast %c8_i32_16 : i32 to vector<8x16xi32>
    %46 = arith.select %44, %28, %45 : vector<8x16xi1>, vector<8x16xi32>
    %cst_17 = arith.constant dense<2147483647> : vector<16xi32>
    %47 = vector.multi_reduction <minsi>, %46, %cst_17 [0] : vector<8x16xi32> to vector<16xi32>
    %48 = vector.shape_cast %47 : vector<16xi32> to vector<1x16xi32>
    %49 = tpu.iota {dimensions = array<i32: 0>} : vector<2x16xi32>
    %c0_i32 = arith.constant 0 : i32
    %50 = vector.broadcast %c0_i32 : i32 to vector<2x16xi32>
    %cst_18 = arith.constant 0.000000e+00 : f32
    %51 = vector.broadcast %cst_18 : f32 to vector<2x16xf32>
    %c0_i32_19 = arith.constant 0 : i32
    %52 = vector.broadcast %c0_i32_19 : i32 to vector<2x16xi32>
    %53 = arith.cmpi eq, %49, %52 : vector<2x16xi32>
    %54 = vector.shape_cast %36 : vector<1x16xi32> to vector<1x16xi32>
    %55 = vector.broadcast %54 : vector<1x16xi32> to vector<2x16xi32>
    %56 = arith.select %53, %55, %50 : vector<2x16xi1>, vector<2x16xi32>
    %c0_i32_20 = arith.constant 0 : i32
    %57 = vector.broadcast %c0_i32_20 : i32 to vector<2x16xi32>
    %58 = arith.cmpi eq, %49, %57 : vector<2x16xi32>
    %59 = vector.shape_cast %30 : vector<1x16xf32> to vector<1x16xf32>
    %60 = vector.broadcast %59 : vector<1x16xf32> to vector<2x16xf32>
    %61 = arith.select %58, %60, %51 : vector<2x16xi1>, vector<2x16xf32>
    %c1_i32 = arith.constant 1 : i32
    %62 = vector.broadcast %c1_i32 : i32 to vector<2x16xi32>
    %63 = arith.cmpi eq, %49, %62 : vector<2x16xi32>
    %64 = vector.shape_cast %48 : vector<1x16xi32> to vector<1x16xi32>
    %65 = vector.broadcast %64 : vector<1x16xi32> to vector<2x16xi32>
    %66 = arith.select %63, %65, %56 : vector<2x16xi1>, vector<2x16xi32>
    %c1_i32_21 = arith.constant 1 : i32
    %67 = vector.broadcast %c1_i32_21 : i32 to vector<2x16xi32>
    %68 = arith.cmpi eq, %49, %67 : vector<2x16xi32>
    %69 = vector.shape_cast %42 : vector<1x16xf32> to vector<1x16xf32>
    %70 = vector.broadcast %69 : vector<1x16xf32> to vector<2x16xf32>
    %71 = arith.select %68, %70, %61 : vector<2x16xi1>, vector<2x16xf32>
    %72 = vector.broadcast %30 : vector<1x16xf32> to vector<2x16xf32>
    %73 = arith.subf %71, %72 : vector<2x16xf32>
    %74 = math.exp %73 : vector<2x16xf32>
    %cst_22 = arith.constant dense<0.000000e+00> : vector<16xf32>
    %75 = vector.multi_reduction <add>, %74, %cst_22 [0] : vector<2x16xf32> to vector<16xf32>
    %76 = vector.shape_cast %75 : vector<16xf32> to vector<1x16xf32>
    %c0_23 = arith.constant 0 : index
    %c0_24 = arith.constant 0 : index
    %77 = vector.load %arg4[%c0_23, %c0_24] : memref<2x16xi32, #tpu.memory_space<vmem>>, vector<2x16xi32>
    tpu.vector_store %arg4[%c0_23, %c0_24], %66 {strides = array<i32>} : memref<2x16xi32, #tpu.memory_space<vmem>>, vector<2x16xi32>,
    %78 = vector.broadcast %76 : vector<1x16xf32> to vector<2x16xf32>
    %79 = arith.divf %74, %78 : vector<2x16xf32>
    %c0_25 = arith.constant 0 : index
    %c0_26 = arith.constant 0 : index
    %80 = vector.load %arg5[%c0_25, %c0_26] : memref<2x16xf32, #tpu.memory_space<vmem>>, vector<2x16xf32>
    tpu.vector_store %arg5[%c0_25, %c0_26], %79 {strides = array<i32>} : memref<2x16xf32, #tpu.memory_space<vmem>>, vector<2x16xf32>,
    return
  }
  func.func @transform_0(%arg0: i32) -> (i32, i32) {
    %c0_i32 = arith.constant 0 : i32
    %c0_i32_0 = arith.constant 0 : i32
    return %arg0, %c0_i32 : i32, i32
  }
  func.func @transform_1(%arg0: i32) -> (i32, i32) {
    %c0_i32 = arith.constant 0 : i32
    %c0_i32_0 = arith.constant 0 : i32
    %c0_i32_1 = arith.constant 0 : i32
    return %c0_i32, %c0_i32_0 : i32, i32
  }
  func.func @transform_2(%arg0: i32) -> (i32, i32) {
    %c0_i32 = arith.constant 0 : i32
    %c0_i32_0 = arith.constant 0 : i32
    %c0_i32_1 = arith.constant 0 : i32
    return %c0_i32, %c0_i32_0 : i32, i32
  }
  func.func @transform_3(%arg0: i32) -> (i32, i32) {
    %c0_i32 = arith.constant 0 : i32
    %c0_i32_0 = arith.constant 0 : i32
    return %c0_i32, %arg0 : i32, i32
  }
  func.func @transform_4(%arg0: i32) -> (i32, i32) {
    %c0_i32 = arith.constant 0 : i32
    %c0_i32_0 = arith.constant 0 : i32
    return %c0_i32, %arg0 : i32, i32
  }
}

</mosaic_0001>

<llo_original>
// kernel: tpu_custom_call.1
$region0: #{tpu_custom_call.1}
  #allocation0 [shape = 'u32[]', space=smem, size = 0x4, offset = 0x4, fixed_abs, tag = 'smem constant byte address 0x4 - core index']
  #allocation1 [shape = 'u32[72,128]{1,0:T(1,128)}', space=vmem, size = 0x9000, scoped, tag = 'internal scratch']
  %s0 = inlined_call_operand.hbm [shape: f32[16,32], index: 0, kind: input, shape index: {}]
  %s1 = inlined_call_operand.hbm [shape: f32[9,32], index: 1, kind: input, shape index: {}]
  %s2 = inlined_call_operand.vmem [shape: f32[8,1], index: 2, kind: input, shape index: {}]
  %s3 = inlined_call_operand.hbm [shape: s32[2,16], index: 3, kind: output, shape index: {0}]
  %s4 = inlined_call_operand.hbm [shape: f32[2,16], index: 4, kind: output, shape index: {1}]
  %5 = xla_tuple %s3, %s4
  %s6 = sld [smem:[#allocation0]]
  $region38: #{tpu_custom_call.1} parent=0
    _
  %s8 = ssub.s32 1, %s6
  %s9 = scalar_select 0, %s8, %s6
  $region1: #{tpu_custom_call.1} parent=0
    #allocation2 [shape = 'u8[8192]{0}', space=vmem, size = 0x2000, scoped, tag = 'input window, operand 0, single buffered']
    #allocation3 [shape = 's32[1]{0}', space=sflag, size = 0x4, scoped, tag = 'scoped memory for tpu_custom_call.1']
    #allocation4 [shape = 's32[1]{0}', space=sflag, size = 0x4, scoped, tag = 'scoped memory for tpu_custom_call.1']
    #allocation5 [shape = 'u8[8192]{0}', space=vmem, size = 0x2000, scoped, tag = 'input window, operand 1, single buffered']
    #allocation6 [shape = 's32[1]{0}', space=sflag, size = 0x4, scoped, tag = 'scoped memory for tpu_custom_call.1']
    #allocation7 [shape = 'u8[1024]{0}', space=vmem, size = 0x400, scoped, tag = 'output window, operand 0, single buffered']
    #allocation8 [shape = 'u8[1024]{0}', space=vmem, size = 0x400, scoped, tag = 'output window, operand 1, single buffered']
    #allocation9 [shape = 's32[1]{0}', space=sflag, size = 0x4, scoped, tag = 'scoped memory for tpu_custom_call.1']
    %10 = vsyncpa [#allocation3], 0
    %11 = vsyncpa [#allocation6], 0
    %12 = vsyncpa [#allocation4], 0
    %13 = vsyncpa [#allocation9], 0
    // Predicated region
    $region2: #{tpu_custom_call.1} parent=1 // pred_check
      _
    $region3: #{tpu_custom_call.1} parent=1 // pred_check_branch
      %15 = sbr.rel (0) target = $region5
    $region4: #{tpu_custom_call.1} parent=1 // pred_region
      %17 = vsyncadd [#allocation3], 0
      %s18 = sshll.u32 %s0, 4
      %s19 = int_to_ptr.hbm [resolvable:$true] %s18
      %s20 = sshll.u32 [#allocation2], 4
      %s21 = int_to_ptr.vmem [resolvable:$true] %s20
      %26 = dma.hbm_to_vmem [thread:$0]  %s19, 256, %s21, [#allocation3], 128, 128, 8
    $region5: #{tpu_custom_call.1} parent=1 // pred_fallthru
      _
    // Predicated region
    $region6: #{tpu_custom_call.1} parent=1 // pred_check
      _
    $region7: #{tpu_custom_call.1} parent=1 // pred_check_branch
      %28 = sbr.rel (0) target = $region9
    $region8: #{tpu_custom_call.1} parent=1 // pred_region
      %30 = vsyncadd [#allocation6], 0
      %s31 = sshll.u32 %s1, 4
      %s32 = int_to_ptr.hbm [resolvable:$true] %s31
      %s33 = sshll.u32 [#allocation5], 4
      %s34 = int_to_ptr.vmem [resolvable:$true] %s33
      %39 = dma.hbm_to_vmem [thread:$0]  %s32, 256, %s34, [#allocation6], 128, 128, 8
    $region9: #{tpu_custom_call.1} parent=1 // pred_fallthru
      _
    // Predicated region
    $region10: #{tpu_custom_call.1} parent=1 // pred_check
      _
    $region11: #{tpu_custom_call.1} parent=1 // pred_check_branch
      %41 = sbr.rel (0) target = $region13
    $region12: #{tpu_custom_call.1} parent=1 // pred_region
      _
    $region13: #{tpu_custom_call.1} parent=1 // pred_fallthru
      _
    // Predicated region
    $region14: #{tpu_custom_call.1} parent=1 // pred_check
      _
    $region15: #{tpu_custom_call.1} parent=1 // pred_check_branch
      %43 = sbr.rel (0) target = $region17
    $region16: #{tpu_custom_call.1} parent=1 // pred_region
      %45 = dma.done [#allocation3], 256
    $region17: #{tpu_custom_call.1} parent=1 // pred_fallthru
      _
    // Predicated region
    $region18: #{tpu_custom_call.1} parent=1 // pred_check
      _
    $region19: #{tpu_custom_call.1} parent=1 // pred_check_branch
      %47 = sbr.rel (0) target = $region21
    $region20: #{tpu_custom_call.1} parent=1 // pred_region
      %49 = dma.done [#allocation6], 256
    $region21: #{tpu_custom_call.1} parent=1 // pred_fallthru
      _
    %v50 = vld [vmem:[#allocation2] sm:$0xff]
    %v51 = vld [vmem:[#allocation2 + $0x8] sm:$0xff]
    %v52 = vld [vmem:[#allocation5] sm:$0xff]
    %v53 = vld [vmem:[#allocation5 + $0x8] sm:$0x1]
    %vm54 = vcmask 261120
    %v56 = vsel %vm54, %v52, 0
    %v59 = vsel %vm54, %v53, 0
    %v62 = vsel %vm54, %v50, 0
    %v65 = vsel %vm54, %v51, 0
    %67 = vmatpush.xpose.msra.mxu0 0.0
    %68 = vmatpush.xpose.msra.mxu0 0.0
    %69 = vmatpush.xpose.msra.mxu0 0.0
    %70 = vmatpush.xpose.msra.mxu0 0.0
    %71 = vmatpush.xpose.msra.mxu0 0.0
    %72 = vmatpush.xpose.msra.mxu0 0.0
    %73 = vmatpush.xpose.msra.mxu0 0.0
    %74 = vmatpush.xpose.msra.mxu0 0.0
    %75 = vmatpush.xpose.msra.mxu0 0.0
    %76 = vmatpush.xpose.msra.mxu0 0.0
    %77 = vmatpush.xpose.msra.mxu0 0.0
    %78 = vmatpush.xpose.msra.mxu0 0.0
    %79 = vmatpush.xpose.msra.mxu0 0.0
    %80 = vmatpush.xpose.msra.mxu0 0.0
    %81 = vmatpush.xpose.msra.mxu0 %v65
    %82 = vmatpush.xpose.msra.mxu0 %v62
    %83 = vmatmul.f32.gmra.mxu0 %v56
    %v84 = vpop.f32.mrf.mxu0
    %v85 = vadd.f32 0.0, %v84
    %86 = vmatmul.f32.gmra.mxu0 %v59
    %v87 = vpop.f32.mrf.mxu0
    %v88 = vadd.f32 0.0, %v87
    %89 = vdwg.mxu0
    %v90 = vmul.f32 %v88, 0.03125
    %v91 = vmul.f32 %v50, %v50
    %v92 = vmul.f32 %v51, %v51
    %v94 = vsel %vm54, %v91, 0
    %v97 = vsel %vm54, %v92, 0
    %99 = vmatpush.xpose.msra.mxu0 0.0
    %100 = vmatpush.xpose.msra.mxu0 0.0
    %101 = vmatpush.xpose.msra.mxu0 0.0
    %102 = vmatpush.xpose.msra.mxu0 0.0
    %103 = vmatpush.xpose.msra.mxu0 0.0
    %104 = vmatpush.xpose.msra.mxu0 0.0
    %105 = vmatpush.xpose.msra.mxu0 0.0
    %106 = vmatpush.xpose.msra.mxu0 0.0
    %107 = vmatpush.xpose.msra.mxu0 0.0
    %108 = vmatpush.xpose.msra.mxu0 0.0
    %109 = vmatpush.xpose.msra.mxu0 0.0
    %110 = vmatpush.xpose.msra.mxu0 0.0
    %111 = vmatpush.xpose.msra.mxu0 0.0
    %112 = vmatpush.xpose.msra.mxu0 0.0
    %113 = vmatpush.xpose.msra.mxu0 %v97
    %114 = vmatpush.xpose.msra.mxu0 %v94
    %115 = vmatmul.f32.gmra.mxu0 %v56
    %v116 = vpop.f32.mrf.mxu0
    %117 = vmatmul.f32.gmra.mxu0 %v59
    %v118 = vpop.f32.mrf.mxu0
    %v119 = vadd.f32 0.0, %v118
    %120 = vdwg.mxu0
    %v121 = vmul.f32 %v119, 0.03125
    %v122 = vmul.f32 %v90, %v90
    %v123 = vsub.f32 %v121, %v122
    %v124 = vmax.f32 %v123, 0.0
    %v125 = vadd.f32 %v124, 1e-05
    %v126 = vrsqrt.pop %v125
    %v127 = vmul.f32 %v126, %v125
    %v128 = vmul.f32 %v127, %v126
    %v129 = vmul.f32 0.5, %v128
    %v130 = vsub.f32 1.5, %v129
    %v131 = vmul.f32 %v126, %v130
    %vm132 = vweird.f32 %v125
    %vm133 = vweird.f32 %v126
    %vm134 = vmor %vm132, %vm133
    %v135 = vsel %vm134, %v126, %v131
    %v136 = vld [vmem:[%s2] sm:$0xff]
    %138 = vset.pattern.permute.xlu0 0
    %139 = vperm.xlu0 %138, %v136
    %v140 = vpop.permute.xlu0 %139
    %v142 = vperm.slane %v90, 0
    %v143 = vmul.f32 %v140, %v142
    %v144 = vsub.f32 %v85, %v143
    %v145 = vand.u32 2147483647, %v144
    %v146 = vperm.slane %v135, 0
    %v147 = vmul.f32 %v145, %v146
    %v148 = vlaneseq
    %v149 = vshrl.u32 %v148, 7
    %vm150 = vcmask 130048
    %v151 = vsel %vm150, %v147, -inf
    %v152 = vrot.slane %v151, 4
    %v153 = vmax.f32 %v151, %v152
    %v154 = vrot.slane %v153, 2
    %v155 = vmax.f32 %v153, %v154
    %v156 = vrot.slane %v155, 1
    %v157 = vmax.f32 %v155, %v156
    %vm158 = vcmp.eq.f32.partialorder %v147, %v157
    %v159 = vsel %vm158, %v149, 8
    %v160 = vsel %vm150, %v159, 2147483647
    %v161 = vrot.slane %v160, 4
    %vm162 = vcmp.lt.s32.totalorder %v160, %v161
    %v163 = vsel %vm162, %v160, %v161
    %v164 = vrot.slane %v163, 2
    %vm165 = vcmp.lt.s32.totalorder %v163, %v164
    %v166 = vsel %vm165, %v163, %v164
    %v167 = vrot.slane %v166, 1
    %vm168 = vcmp.lt.s32.totalorder %v166, %v167
    %v169 = vsel %vm168, %v166, %v167
    %vm170 = vcmp.eq.s32.totalorder %v149, %v169
    %v171 = vsel %vm170, -inf, %v147
    %v172 = vsel %vm150, %v171, -inf
    %v173 = vrot.slane %v172, 4
    %v174 = vmax.f32 %v172, %v173
    %v175 = vrot.slane %v174, 2
    %v176 = vmax.f32 %v174, %v175
    %v177 = vrot.slane %v176, 1
    %v178 = vmax.f32 %v176, %v177
    %vm179 = vcmp.eq.f32.partialorder %v171, %v178
    %v180 = vsel %vm179, %v149, 8
    %v181 = vsel %vm150, %v180, 2147483647
    %v182 = vrot.slane %v181, 4
    %vm183 = vcmp.lt.s32.totalorder %v181, %v182
    %v184 = vsel %vm183, %v181, %v182
    %v185 = vrot.slane %v184, 2
    %vm186 = vcmp.lt.s32.totalorder %v184, %v185
    %v187 = vsel %vm186, %v184, %v185
    %v188 = vrot.slane %v187, 1
    %vm189 = vcmp.lt.s32.totalorder %v187, %v188
    %v190 = vsel %vm189, %v187, %v188
    %vm191 = vcmp.eq.s32.totalorder %v149, 0
    %v192 = vsel %vm191, %v169, 0
    %v193 = vsel %vm191, %v157, 0.0
    %vm194 = vcmp.eq.s32.totalorder %v149, 1
    %v195 = vsel %vm194, %v190, %v192
    %v196 = vsel %vm194, %v178, %v193
    %v197 = vsub.f32 %v196, %v157
    %v198 = vmul.f32 %v197, 1.442695
    %v199 = vpow.pop %v198
    %vm200 = vcmask 123904
    %v201 = vsel %vm200, %v199, 0.0
    %v202 = vrot.slane %v201, 4
    %v203 = vadd.f32 %v201, %v202
    %v204 = vrot.slane %v203, 2
    %v205 = vadd.f32 %v203, %v204
    %v206 = vrot.slane %v205, 1
    %v207 = vadd.f32 %v205, %v206
    %208 = vst.msk [vmem:[#allocation7] sm:$0x3] %vm200, %v195
    %v209 = vrcp.pop %v207
    %v210 = vmul.f32 %v207, %v209
    %v211 = vsub.f32 1.0, %v210
    %v212 = vmul.f32 %v209, %v211
    %v213 = vadd.f32 %v209, %v212
    %vm214 = vweird.f32 %v207
    %vm215 = vweird.f32 %v209
    %vm216 = vmor %vm214, %vm215
    %v217 = vsel %vm216, %v209, %v213
    %v218 = vand.u32 2147483647, %v207
    %vm219 = vcmp.eq.f32.partialorder %v218, 8.507059e+37
    %v220 = vand.u32 %v207, 2147483648
    %v221 = vor.u32 1.1754944e-38, %v220
    %v222 = vsel %vm219, %v221, %v217
    %v223 = vmul.f32 %v199, %v222
    %224 = vst.msk [vmem:[#allocation8] sm:$0x3] %vm200, %v223
    // Predicated region
    $region22: #{tpu_custom_call.1} parent=1 // pred_check
      _
    $region23: #{tpu_custom_call.1} parent=1 // pred_check_branch
      %226 = sbr.rel (0) target = $region25
    $region24: #{tpu_custom_call.1} parent=1 // pred_region
      %228 = vsyncadd [#allocation4], 0
      %s230 = sshll.u32 [#allocation7], 4
      %s231 = int_to_ptr.vmem [resolvable:$true] %s230
      %s232 = sshll.u32 %s3, 4
      %s233 = int_to_ptr.hbm [resolvable:$true] %s232
      %235 = dma.vmem_to_hbm [thread:$0]  %s231, 32, %s233, [#allocation4]
    $region25: #{tpu_custom_call.1} parent=1 // pred_fallthru
      _
    // Predicated region
    $region26: #{tpu_custom_call.1} parent=1 // pred_check
      _
    $region27: #{tpu_custom_call.1} parent=1 // pred_check_branch
      %237 = sbr.rel (0) target = $region29
    $region28: #{tpu_custom_call.1} parent=1 // pred_region
      %239 = vsyncadd [#allocation9], 0
      %s241 = sshll.u32 [#allocation8], 4
      %s242 = int_to_ptr.vmem [resolvable:$true] %s241
      %s243 = sshll.u32 %s4, 4
      %s244 = int_to_ptr.hbm [resolvable:$true] %s243
      %246 = dma.vmem_to_hbm [thread:$0]  %s242, 32, %s244, [#allocation9]
    $region29: #{tpu_custom_call.1} parent=1 // pred_fallthru
      _
    // Predicated region
    $region30: #{tpu_custom_call.1} parent=1 // pred_check
      _
    $region31: #{tpu_custom_call.1} parent=1 // pred_check_branch
      %248 = sbr.rel (0) target = $region33
    $region32: #{tpu_custom_call.1} parent=1 // pred_region
      %250 = dma.done [#allocation4], 32
    $region33: #{tpu_custom_call.1} parent=1 // pred_fallthru
      _
    // Predicated region
    $region34: #{tpu_custom_call.1} parent=1 // pred_check
      _
    $region35: #{tpu_custom_call.1} parent=1 // pred_check_branch
      %252 = sbr.rel (0) target = $region37
    $region36: #{tpu_custom_call.1} parent=1 // pred_region
      %254 = dma.done [#allocation9], 32
    $region37: #{tpu_custom_call.1} parent=1 // pred_fallthru
      _
    %255 = vsyncpa [#allocation3], 1
    %256 = vsyncpa [#allocation6], 1
    %257 = vsyncpa [#allocation4], 1
    %258 = vsyncpa [#allocation9], 1

</llo_original>
